<compile_context>
chip_gen: v7x
topology: tpu7x:2x2x1
jax: 0.10.0
libtpu: 0.0.40
codegen_flags: <defaults>
</compile_context>

<pallas_src>
import functools

import jax
import jax.numpy as jnp
from jax.experimental import pallas as pl
from jax.experimental.pallas import tpu as pltpu

_LANE = 128
_NEG_SLOPE = 0.1  # nn.LeakyReLU(0.1) in the original module


def _one_conv_kernel(x_ref, w_ref, b_ref, o_ref, *, G0, G, Wp, Bb, slope):
    """One grid step: Bb zero-padded images, each a (G0, HWpo) flat slab."""
    HWpo = x_ref.shape[-1]
    # Flat-index offsets of the 9 taps on the (H+2, W+2) zero-padded layout.
    offsets = [dy * Wp + dx for dy in (-1, 0, 1) for dx in (-1, 0, 1)]

    # Fused concat([x, y]): pass x through as the first G0 output channels with
    # one block-wide lane-dense store (x read from HBM exactly once).
    o_ref[:, 0:G0, :] = x_ref[...]

    w_mat = w_ref[...]                 # (G, 9*G0), VMEM resident
    bias = b_ref[...]                  # (G, 1),    loaded once per grid step

    for bi in range(Bb):               # Bb kept small (<= 8) by the wrapper
        x = x_ref[bi]                  # (G0, HWpo)
        # 3x3 conv as 9 static lane rolls; the zero border is baked into the
        # layout, so no boundary masks are needed (wrap never reaches a valid
        # output position).
        rolls = [x if d == 0 else pltpu.roll(x, (-d) % HWpo, axis=1)
                 for d in offsets]
        taps = jnp.concatenate(rolls, axis=0)               # (9*G0, HWpo)
        # Channel contraction on the MXU with exact f32 accumulation.
        acc = jnp.dot(w_mat, taps,
                      precision=jax.lax.Precision.HIGHEST,
                      preferred_element_type=jnp.float32) + bias
        y = jnp.where(acc >= 0, acc, slope * acc)            # LeakyReLU(slope)
        o_ref[bi, G0:G0 + G, :] = y.astype(o_ref.dtype)
    # TODO(synk): for very large H*W, add an inner lane-chunk loop (or a spatial
    # grid axis with a 1-row halo) to bound vreg pressure and fit v7x's 64 MiB VMEM.


def _num_tensorcores():
    """Best-effort TensorCore count (v7x has 2 per chip); conservative fallback 2."""
    try:
        info = pltpu.get_tpu_info()
        for name in ("num_cores", "core_count", "num_tensorcores", "tensorcore_count"):
            v = getattr(info, name, None)
            if isinstance(v, int) and v > 0:
                return v
    except Exception:
        pass
    return 2


def _pick_batch_tile(B, per_elem_bytes, budget_bytes, min_grid_steps, max_bb=8):
    """Largest divisor of B that fits the per-step VMEM budget, bounds in-kernel
    unrolling, and keeps >= min_grid_steps grid steps when B allows it."""
    cap = max(1, budget_bytes // per_elem_bytes)
    cap = min(cap, max_bb)
    if B >= min_grid_steps > 1:          # only enforce multi-step grids on >=2-TC parts
        cap = min(cap, max(1, B // min_grid_steps))
    bb = 1
    for d in range(1, B + 1):
        if B % d == 0 and d <= cap:
            bb = d
    return bb


def one_conv(x, w, b, *, negative_slope=_NEG_SLOPE):
    """x: (B, G0, H, W) f32, w: (G, G0, 3, 3), b: (G,). Returns (B, G0+G, H, W)."""
    B, G0, H, W = x.shape
    G = w.shape[0]
    Hp, Wp = H + 2, W + 2                                   # conv zero-padding ring
    HWp = Hp * Wp
    HWpo = ((HWp + _LANE - 1) // _LANE) * _LANE             # lane-dense flat spatial

    # Embed the conv's zero padding in the layout, then lane-pad to 128.
    # TODO(synk): when fusing several one_conv layers, keep this padded layout
    # across layers so the pad/depad copies below happen only once per network.
    xp = jnp.pad(x.astype(jnp.float32), ((0, 0), (0, 0), (1, 1), (1, 1)))
    x_flat = xp.reshape(B, G0, HWp)
    if HWpo != HWp:
        x_flat = jnp.pad(x_flat, ((0, 0), (0, 0), (0, HWpo - HWp)))

    # (G, 9*G0) weight matrix; column index t*G0 + c with t = ky*3 + kx, matching
    # the in-kernel tap stacking order.
    w_mat = jnp.transpose(w, (0, 2, 3, 1)).reshape(G, 9 * G0).astype(jnp.float32)
    b2 = b.reshape(G, 1).astype(jnp.float32)

    # Batch tile sized against a ~12 MiB block budget (double-buffered in+out
    # stays well under v7x's 64 MiB VMEM), keeping >= #TensorCores grid steps.
    per_elem_bytes = (G0 + (G0 + G)) * HWpo * 4
    Bb = _pick_batch_tile(B, per_elem_bytes, budget_bytes=12 * 1024 * 1024,
                          min_grid_steps=_num_tensorcores())
    grid = (B // Bb,)

    in_block = Bb * G0 * HWpo * 4
    out_block = Bb * (G0 + G) * HWpo * 4
    vmem_limit = int(min(64 * 1024 * 1024,
                         max(32 * 1024 * 1024,
                             2 * (in_block + out_block) + (2 << 20))))

    kernel = functools.partial(_one_conv_kernel, G0=G0, G=G, Wp=Wp, Bb=Bb,
                               slope=negative_slope)

    out_flat = pl.pallas_call(
        kernel,
        out_shape=jax.ShapeDtypeStruct((B, G0 + G, HWpo), jnp.float32),
        grid_spec=pltpu.PrefetchScalarGridSpec(
            num_scalar_prefetch=0,
            grid=grid,
            in_specs=[
                pl.BlockSpec((Bb, G0, HWpo), lambda i: (i, 0, 0)),   # x slab
                pl.BlockSpec((G, 9 * G0), lambda i: (0, 0)),         # tap weights
                pl.BlockSpec((G, 1), lambda i: (0, 0)),              # bias
            ],
            out_specs=pl.BlockSpec((Bb, G0 + G, HWpo), lambda i: (i, 0, 0)),
        ),
        compiler_params=pltpu.CompilerParams(
            dimension_semantics=("parallel",),
            vmem_limit_bytes=vmem_limit,
        ),
    )(x_flat, w_mat, b2)

    # Drop the lane pad and the zero-border ring.
    out = out_flat[:, :, :HWp].reshape(B, G0 + G, Hp, Wp)[:, :, 1:H + 1, 1:W + 1]
    return out


def one_conv_ref(x, w, b, negative_slope=_NEG_SLOPE):
    """Pure-JAX reference matching the PyTorch forward."""
    y = jax.lax.conv_general_dilated(
        x, w, window_strides=(1, 1), padding=((1, 1), (1, 1)),
        dimension_numbers=("NCHW", "OIHW", "NCHW"),
        precision=jax.lax.Precision.HIGHEST)
    y = y + b.reshape(1, -1, 1, 1)
    y = jnp.where(y >= 0, y, negative_slope * y)
    return jnp.concatenate([x, y], axis=1)


if __name__ == "__main__":
    B, G0, G, H, W = 2, 4, 8, 16, 16

    key = jax.random.PRNGKey(0)
    k_x, k_w, k_b = jax.random.split(key, 3)
    x = jax.random.normal(k_x, (B, G0, H, W), dtype=jnp.float32)
    # Conv2d(G0, G, 3).weight has shape (G, G0, 3, 3); bias has shape (G,).
    w = jax.random.normal(k_w, (G, G0, 3, 3), dtype=jnp.float32) * 0.1
    b = jax.random.normal(k_b, (G,), dtype=jnp.float32) * 0.1

    out = one_conv(x, w, b)
    out = jax.block_until_ready(out)

    ref = one_conv_ref(x, w, b)
    assert out.shape == (B, G0 + G, H, W)
    assert jnp.allclose(out, ref, atol=1e-4, rtol=1e-4), "mismatch vs reference"

    print("KERNEL_OK")
</pallas_src>

<mosaic_0001>
module attributes {stable_mosaic.version = 11 : i64} {
  func.func @_one_conv_kernel(%arg0: i32, %arg1: memref<1x4x384xf32, #tpu.memory_space<vmem>>, %arg2: memref<8x36xf32, #tpu.memory_space<vmem>>, %arg3: memref<8x1xf32, #tpu.memory_space<vmem>>, %arg4: memref<1x12x384xf32, #tpu.memory_space<vmem>>) attributes {dimension_semantics = [#tpu.dimension_semantics<parallel>], iteration_bounds = array<i64: 2>, scalar_prefetch = 0 : i64, scratch_operands = 0 : i64, tpu.core_type = #tpu.core_type<tc>, window_params = [{transform_indices = @transform_0, window_bounds = array<i64: 1, 4, 384>}, {pipeline_mode = #tpu.pipeline_mode<synchronous>, transform_indices = @transform_1, window_bounds = array<i64: 8, 36>}, {pipeline_mode = #tpu.pipeline_mode<synchronous>, transform_indices = @transform_2, window_bounds = array<i64: 8, 1>}, {transform_indices = @transform_3, window_bounds = array<i64: 1, 12, 384>}]} {
    %c0 = arith.constant 0 : index
    %c0_0 = arith.constant 0 : index
    %c0_1 = arith.constant 0 : index
    %0 = vector.load %arg1[%c0, %c0_0, %c0_1] : memref<1x4x384xf32, #tpu.memory_space<vmem>>, vector<1x4x384xf32>
    %c0_2 = arith.constant 0 : index
    %c0_3 = arith.constant 0 : index
    %c0_4 = arith.constant 0 : index
    %1 = vector.load %arg4[%c0_2, %c0_3, %c0_4] : memref<1x12x384xf32, #tpu.memory_space<vmem>>, vector<1x4x384xf32>
    tpu.vector_store %arg4[%c0_2, %c0_3, %c0_4], %0 {strides = array<i32>} : memref<1x12x384xf32, #tpu.memory_space<vmem>>, vector<1x4x384xf32>,
    %c0_5 = arith.constant 0 : index
    %c0_6 = arith.constant 0 : index
    %2 = vector.load %arg2[%c0_5, %c0_6] : memref<8x36xf32, #tpu.memory_space<vmem>>, vector<8x36xf32>
    %c0_7 = arith.constant 0 : index
    %c0_8 = arith.constant 0 : index
    %3 = vector.load %arg3[%c0_7, %c0_8] : memref<8x1xf32, #tpu.memory_space<vmem>>, vector<8x1xf32>
    %c0_9 = arith.constant 0 : index
    %c0_10 = arith.constant 0 : index
    %c0_11 = arith.constant 0 : index
    %4 = vector.load %arg1[%c0_9, %c0_10, %c0_11] : memref<1x4x384xf32, #tpu.memory_space<vmem>>, vector<1x4x384xf32>
    %5 = vector.shape_cast %4 : vector<1x4x384xf32> to vector<4x384xf32>
    %c19_i32 = arith.constant 19 : i32
    %6 = tpu.dynamic_rotate %5 by %c19_i32 dim 1 : vector<4x384xf32>, i32 -> vector<4x384xf32>
    %c18_i32 = arith.constant 18 : i32
    %7 = tpu.dynamic_rotate %5 by %c18_i32 dim 1 : vector<4x384xf32>, i32 -> vector<4x384xf32>
    %c17_i32 = arith.constant 17 : i32
    %8 = tpu.dynamic_rotate %5 by %c17_i32 dim 1 : vector<4x384xf32>, i32 -> vector<4x384xf32>
    %c1_i32 = arith.constant 1 : i32
    %9 = tpu.dynamic_rotate %5 by %c1_i32 dim 1 : vector<4x384xf32>, i32 -> vector<4x384xf32>
    %c383_i32 = arith.constant 383 : i32
    %10 = tpu.dynamic_rotate %5 by %c383_i32 dim 1 : vector<4x384xf32>, i32 -> vector<4x384xf32>
    %c367_i32 = arith.constant 367 : i32
    %11 = tpu.dynamic_rotate %5 by %c367_i32 dim 1 : vector<4x384xf32>, i32 -> vector<4x384xf32>
    %c366_i32 = arith.constant 366 : i32
    %12 = tpu.dynamic_rotate %5 by %c366_i32 dim 1 : vector<4x384xf32>, i32 -> vector<4x384xf32>
    %c365_i32 = arith.constant 365 : i32
    %13 = tpu.dynamic_rotate %5 by %c365_i32 dim 1 : vector<4x384xf32>, i32 -> vector<4x384xf32>
    %14 = tpu.concatenate %6, %7, %8, %9, %5, %10, %11, %12, %13 in 0 : vector<4x384xf32>, vector<4x384xf32>, vector<4x384xf32>, vector<4x384xf32>, vector<4x384xf32>, vector<4x384xf32>, vector<4x384xf32>, vector<4x384xf32>, vector<4x384xf32> -> vector<36x384xf32>
    %cst = arith.constant dense<0.000000e+00> : vector<8x384xf32>
    %15 = tpu.matmul %2, %14, %cst {dimension_numbers = #tpu.dot_dimension_numbers<[1], [0], [0], [1], [0, 0, 1, 1], [], []>, precision = #tpu.contract_precision<fp32>} : vector<8x36xf32>, vector<36x384xf32>, vector<8x384xf32> -> vector<8x384xf32>
    %16 = vector.broadcast %3 : vector<8x1xf32> to vector<8x384xf32>
    %17 = arith.addf %15, %16 : vector<8x384xf32>
    %cst_12 = arith.constant 0.000000e+00 : f32
    %18 = vector.broadcast %cst_12 : f32 to vector<8x384xf32>
    %19 = arith.cmpf oge, %17, %18 : vector<8x384xf32>
    %cst_13 = arith.constant 1.000000e-01 : f32
    %20 = vector.broadcast %cst_13 : f32 to vector<8x384xf32>
    %21 = arith.mulf %20, %17 : vector<8x384xf32>
    %22 = arith.select %19, %17, %21 : vector<8x384xi1>, vector<8x384xf32>
    %c0_14 = arith.constant 0 : index
    %c4 = arith.constant 4 : index
    %c0_15 = arith.constant 0 : index
    %23 = vector.load %arg4[%c0_14, %c4, %c0_15] : memref<1x12x384xf32, #tpu.memory_space<vmem>>, vector<1x8x384xf32>
    %24 = vector.shape_cast %23 : vector<1x8x384xf32> to vector<8x384xf32>
    %25 = vector.shape_cast %22 : vector<8x384xf32> to vector<1x8x384xf32>
    tpu.vector_store %arg4[%c0_14, %c4, %c0_15], %25 {strides = array<i32>} : memref<1x12x384xf32, #tpu.memory_space<vmem>>, vector<1x8x384xf32>,
    return
  }
  func.func @transform_0(%arg0: i32) -> (i32, i32, i32) {
    %c0_i32 = arith.constant 0 : i32
    %c0_i32_0 = arith.constant 0 : i32
    %c0_i32_1 = arith.constant 0 : i32
    return %arg0, %c0_i32, %c0_i32_0 : i32, i32, i32
  }
  func.func @transform_1(%arg0: i32) -> (i32, i32) {
    %c0_i32 = arith.constant 0 : i32
    %c0_i32_0 = arith.constant 0 : i32
    %c0_i32_1 = arith.constant 0 : i32
    return %c0_i32, %c0_i32_0 : i32, i32
  }
  func.func @transform_2(%arg0: i32) -> (i32, i32) {
    %c0_i32 = arith.constant 0 : i32
    %c0_i32_0 = arith.constant 0 : i32
    %c0_i32_1 = arith.constant 0 : i32
    return %c0_i32, %c0_i32_0 : i32, i32
  }
  func.func @transform_3(%arg0: i32) -> (i32, i32, i32) {
    %c0_i32 = arith.constant 0 : i32
    %c0_i32_0 = arith.constant 0 : i32
    %c0_i32_1 = arith.constant 0 : i32
    return %arg0, %c0_i32, %c0_i32_0 : i32, i32, i32
  }
}

</mosaic_0001>

<llo_original>
// kernel: tpu_custom_call.1
$region0: #{tpu_custom_call.1}
  #allocation0 [shape = 'u32[]', space=smem, size = 0x4, offset = 0x4, fixed_abs, tag = 'smem constant byte address 0x4 - core index']
  #allocation1 [shape = 'u32[144,128]{1,0:T(1,128)}', space=vmem, size = 0x12000, scoped, tag = 'internal scratch']
  %s0 = inlined_call_operand.hbm [shape: f32[2,4,384], index: 0, kind: input, shape index: {}]
  %s1 = inlined_call_operand.vmem [shape: f32[8,36], index: 1, kind: input, shape index: {}]
  %s2 = inlined_call_operand.vmem [shape: f32[8,1], index: 2, kind: input, shape index: {}]
  %s3 = inlined_call_operand.vmem [shape: f32[2,12,384], index: 3, kind: output, shape index: {}]
  %s4 = sld [smem:[#allocation0]]
  $region49: #{tpu_custom_call.1} parent=0
    _
  %s6 = ssub.s32 1, %s4
  %s7 = scalar_select 0, %s6, %s4
  $region1: #{tpu_custom_call.1} parent=0
    #allocation2 [shape = 'u8[12288]{0}', space=vmem, size = 0x3000, scoped, tag = 'input window, operand 0']
    #allocation3 [shape = 's32[2]{0}', space=sflag, size = 0x8, scoped, tag = 'scoped memory for tpu_custom_call.1']
    %8 = vsyncpa [#allocation3], 0
    %s9 = scalar_lea.sflag [#allocation3], 1
    %10 = vsyncpa %s9, 0
    loop: start=0, step=1, limit=4
    $region2: #{tpu_custom_call.1} parent=1 // loop_pre_header
      _
    $region3: #{tpu_custom_call.1} parent=1 // loop_header
      %s12 = sphi 0, %s16
      %p13 = scmp.ge.s32.totalorder %s12, 4
      %s22 = sphi 0, %s24
      %s25 = sphi 0, %s22
      %s26 = sphi 0, %s25
      %s42 = sphi 0, %s26
      %s46 = sphi 0, %s46
      %s48 = sphi 0, %s46
      %s49 = sphi 0, %s48
      %s63 = sphi 0, %s49
      %s67 = sphi 0, %s67
      %s69 = sphi 0, %s67
      %s70 = sphi 0, %s69
      %s84 = sphi 0, %s70
      %s90 = sphi 0, %s92
      %s93 = sphi 0, %s90
      %s94 = sphi 0, %s93
      %s110 = sphi 0, %s94
    $region4: #{tpu_custom_call.1} parent=1 // loop_header_branch
      %15 = sbr.rel (%p13) target = $region8
    $region5: #{tpu_custom_call.1} parent=1 // loop_body
      %s17 = ssub.s32 %s12, 1
      %s18 = ssub.s32 %s12, 2
      %s19 = sadd.s32 %s12, 1
      %s20 = ssub.s32 %s12, %s19
      %p21 = scmp.eq.s32.totalorder %s20, 0
      %s23 = sadd.s32 %s22, 1
      %s24 = scalar_select %p21, %s22, %s23
      %p27 = pneg %p21
      %p28 = scmp.eq.s32.totalorder %s12, 1
      %p29 = por %p27, %p28
      %p30 = scmp.ne.s32.totalorder %s22, %s25
      %p31 = scmp.eq.s32.totalorder %s12, 0
      %p32 = por %p30, %p31
      %p33 = scmp.ne.s32.totalorder %s22, %s25
      %p34 = scmp.eq.s32.totalorder %s17, 1
      %p35 = por %p33, %p34
      %p36 = scmp.ne.s32.totalorder %s25, %s26
      %p37 = scmp.eq.s32.totalorder %s17, 0
      %p38 = por %p36, %p37
      %p39 = scmp.ne.s32.totalorder %s25, %s26
      %p40 = scmp.eq.s32.totalorder %s18, 1
      %p41 = por %p39, %p40
      %p43 = scmp.ne.s32.totalorder %s26, %s42
      %p44 = scmp.eq.s32.totalorder %s18, 0
      %p45 = por %p43, %p44
      %s47 = sadd.s32 %s46, 1
      %p50 = scmp.eq.s32.totalorder %s12, 1
      %p51 = scmp.ne.s32.totalorder %s46, %s48
      %p52 = scmp.eq.s32.totalorder %s12, 0
      %p53 = por %p51, %p52
      %p54 = scmp.ne.s32.totalorder %s46, %s48
      %p55 = scmp.eq.s32.totalorder %s17, 1
      %p56 = por %p54, %p55
      %p57 = scmp.ne.s32.totalorder %s48, %s49
      %p58 = scmp.eq.s32.totalorder %s17, 0
      %p59 = por %p57, %p58
      %p60 = scmp.ne.s32.totalorder %s48, %s49
      %p61 = scmp.eq.s32.totalorder %s18, 1
      %p62 = por %p60, %p61
      %p64 = scmp.ne.s32.totalorder %s49, %s63
      %p65 = scmp.eq.s32.totalorder %s18, 0
      %p66 = por %p64, %p65
      %s68 = sadd.s32 %s67, 1
      %p71 = scmp.eq.s32.totalorder %s12, 1
      %p72 = scmp.ne.s32.totalorder %s67, %s69
      %p73 = scmp.eq.s32.totalorder %s12, 0
      %p74 = por %p72, %p73
      %p75 = scmp.ne.s32.totalorder %s67, %s69
      %p76 = scmp.eq.s32.totalorder %s17, 1
      %p77 = por %p75, %p76
      %p78 = scmp.ne.s32.totalorder %s69, %s70
      %p79 = scmp.eq.s32.totalorder %s17, 0
      %p80 = por %p78, %p79
      %p81 = scmp.ne.s32.totalorder %s69, %s70
      %p82 = scmp.eq.s32.totalorder %s18, 1
      %p83 = por %p81, %p82
      %p85 = scmp.ne.s32.totalorder %s70, %s84
      %p86 = scmp.eq.s32.totalorder %s18, 0
      %p87 = por %p85, %p86
      %s88 = ssub.s32 %s12, %s19
      %p89 = scmp.eq.s32.totalorder %s88, 0
      %s91 = sadd.s32 %s90, 1
      %s92 = scalar_select %p89, %s90, %s91
      %p95 = pneg %p89
      %p96 = scmp.eq.s32.totalorder %s12, 1
      %p97 = por %p95, %p96
      %p98 = scmp.ne.s32.totalorder %s90, %s93
      %p99 = scmp.eq.s32.totalorder %s12, 0
      %p100 = por %p98, %p99
      %p101 = scmp.ne.s32.totalorder %s90, %s93
      %p102 = scmp.eq.s32.totalorder %s17, 1
      %p103 = por %p101, %p102
      %p104 = scmp.ne.s32.totalorder %s93, %s94
      %p105 = scmp.eq.s32.totalorder %s17, 0
      %p106 = por %p104, %p105
      %p107 = scmp.ne.s32.totalorder %s93, %s94
      %p108 = scmp.eq.s32.totalorder %s18, 1
      %p109 = por %p107, %p108
      %p111 = scmp.ne.s32.totalorder %s94, %s110
      %p112 = scmp.eq.s32.totalorder %s18, 0
      %p113 = por %p111, %p112
      %p114 = scmp.le.s32.totalorder 1, %s12
      %p115 = scmp.lt.s32.totalorder %s12, 3
      %p116 = pnand %p114, %p115
      %p117 = pneg %p116
      // Predicated region
      $region9: #{tpu_custom_call.1} parent=5 // pred_check
        _
      $region10: #{tpu_custom_call.1} parent=5 // pred_check_branch
        %119 = sbr.rel (%p116) target = $region12
      $region11: #{tpu_custom_call.1} parent=5 // pred_region
        %s120 = ssub.s32 %s12, 1
        // Predicated region
        $region13: #{tpu_custom_call.1} parent=11 // pred_check
          %p121 = pneg %p59
        $region14: #{tpu_custom_call.1} parent=11 // pred_check_branch
          %123 = sbr.rel (%p121) target = $region16
        $region15: #{tpu_custom_call.1} parent=11 // pred_region
          _
        $region16: #{tpu_custom_call.1} parent=11 // pred_fallthru
          _
        // Predicated region
        $region17: #{tpu_custom_call.1} parent=11 // pred_check
          %p124 = pneg %p80
        $region18: #{tpu_custom_call.1} parent=11 // pred_check_branch
          %126 = sbr.rel (%p124) target = $region20
        $region19: #{tpu_custom_call.1} parent=11 // pred_region
          _
        $region20: #{tpu_custom_call.1} parent=11 // pred_fallthru
          _
      $region12: #{tpu_custom_call.1} parent=5 // pred_fallthru
        _
      %p127 = scmp.lt.s32.totalorder %s12, 2
      // Predicated region
      $region21: #{tpu_custom_call.1} parent=5 // pred_check
        %p128 = pneg %p127
      $region22: #{tpu_custom_call.1} parent=5 // pred_check_branch
        %130 = sbr.rel (%p128) target = $region24
      $region23: #{tpu_custom_call.1} parent=5 // pred_region
        // Predicated region
        $region25: #{tpu_custom_call.1} parent=23 // pred_check
          %p131 = pneg %p32
        $region26: #{tpu_custom_call.1} parent=23 // pred_check_branch
          %133 = sbr.rel (%p131) target = $region28
        $region27: #{tpu_custom_call.1} parent=23 // pred_region
          %s134 = sand.u32 %s22, 1
          %s135 = scalar_lea.sflag [#allocation3], %s134
          %s136 = sand.u32 %s22, 1
          %s137 = smul.addr %s136, 12
          %s138 = scalar_lea.vmem [#allocation2], %s137
          %s140 = ssub.s32 192, 192
          %141 = vsyncadd %s135, %s140
          %s142 = smul.addr %s12, 3
          %s143 = smul.addr %s142, 64
          %s144 = scalar_lea.hbm %s0, %s143
          %s146 = sshll.u32 %s138, 4
          %s147 = int_to_ptr.vmem [resolvable:$true] %s146
          %149 = dma.hbm_to_vmem [thread:$0]  %s144, 192, %s147, %s135
        $region28: #{tpu_custom_call.1} parent=23 // pred_fallthru
          _
      $region24: #{tpu_custom_call.1} parent=5 // pred_fallthru
        _
      %p150 = scmp.le.s32.totalorder 1, %s12
      %p151 = scmp.lt.s32.totalorder %s12, 3
      %p152 = pnand %p150, %p151
      %p153 = pneg %p152
      // Predicated region
      $region29: #{tpu_custom_call.1} parent=5 // pred_check
        _
      $region30: #{tpu_custom_call.1} parent=5 // pred_check_branch
        %155 = sbr.rel (%p152) target = $region32
      $region31: #{tpu_custom_call.1} parent=5 // pred_region
        %s156 = ssub.s32 %s12, 1
        %s157 = sand.u32 %s25, 1
        %s158 = scalar_lea.sflag [#allocation3], %s157
        %s159 = sand.u32 %s25, 1
        %s160 = smul.addr %s159, 12
        %s161 = scalar_lea.vmem [#allocation2], %s160
        // Predicated region
        $region33: #{tpu_custom_call.1} parent=31 // pred_check
          %p162 = pneg %p38
        $region34: #{tpu_custom_call.1} parent=31 // pred_check_branch
          %164 = sbr.rel (%p162) target = $region36
        $region35: #{tpu_custom_call.1} parent=31 // pred_region
          %165 = dma.done %s158, 192
        $region36: #{tpu_custom_call.1} parent=31 // pred_fallthru
          _
        %s166 = sand.u32 %s25, 1
        %s167 = scalar_lea.sflag [#allocation3], %s166
        %s168 = sand.u32 %s25, 1
        %s169 = smul.addr %s168, 12
        %s170 = scalar_lea.vmem [#allocation2], %s169
        %p171 = pneg %p38
        %p172 = pneg %p35
        %p173 = pneg %p59
        %p174 = pneg %p56
        %p175 = pneg %p80
        %p176 = pneg %p77
        %p177 = pneg %p106
        %p178 = pneg %p103
        %p179 = scmp.lt.s32.totalorder %s17, 1
        %s180 = scalar_select %p179, %s17, 1
        %s181 = smul.addr %s180, 6
        %s182 = smul.addr %s181, 8
        %s183 = scalar_lea.vmem %s3, %s182
        %p184 = scmp.lt.s32.totalorder %s17, 1
        %s185 = scalar_select %p184, %s17, 1
        %s186 = smul.addr %s185, 6
        %s187 = smul.addr %s186, 8
        %s188 = scalar_lea.vmem %s3, %s187
        %v189 = vld [vmem:[%s161] sm:$0xff]
        %v190 = vld [vmem:[%s161 + $0x8] sm:$0xf]
        %v192 = vcombine.high %v189, %v189
        %194 = vst [vmem:[%s188] sm:$0xf] %v189
        %195 = vst [vmem:[%s188 + $0x8] sm:$0xf] %v192
        %196 = vst [vmem:[%s188 + $0x10] sm:$0xf] %v190
        %v197 = vld [vmem:[%s1] sm:$0xff]
        %v198 = vld [vmem:[%s2] sm:$0xff]
        %v199 = vld [vmem:[%s161] sm:$0xff]
        %v200 = vld [vmem:[%s161 + $0x8] sm:$0xf]
        %v202 = vcombine.high %v199, %v199
        %204 = vrot.lane.b32.xlu0 %v199, 19
        %v205 = vpop.permute.xlu0 %204
        %206 = vrot.lane.b32.xlu0 %v202, 19
        %v207 = vpop.permute.xlu0 %206
        %208 = vrot.lane.b32.xlu0 %v200, 19
        %v209 = vpop.permute.xlu0 %208
        %v210 = vlaneseq
        %v211 = vand.u32 %v210, 127
        %vm212 = vcmp.lt.s32.totalorder %v211, 19
        %v213 = vsel %vm212, %v207, %v209
        %v214 = vsel %vm212, %v205, %v207
        %v215 = vsel %vm212, %v209, %v205
        %216 = vrot.lane.b32.xlu0 %v199, 18
        %v217 = vpop.permute.xlu0 %216
        %218 = vrot.lane.b32.xlu0 %v202, 18
        %v219 = vpop.permute.xlu0 %218
        %220 = vrot.lane.b32.xlu0 %v200, 18
        %v221 = vpop.permute.xlu0 %220
        %vm222 = vcmp.lt.s32.totalorder %v211, 18
        %v223 = vsel %vm222, %v219, %v221
        %v224 = vsel %vm222, %v217, %v219
        %v225 = vsel %vm222, %v221, %v217
        %226 = vrot.lane.b32.xlu0 %v199, 17
        %v227 = vpop.permute.xlu0 %226
        %228 = vrot.lane.b32.xlu0 %v202, 17
        %v229 = vpop.permute.xlu0 %228
        %230 = vrot.lane.b32.xlu0 %v200, 17
        %v231 = vpop.permute.xlu0 %230
        %vm232 = vcmp.lt.s32.totalorder %v211, 17
        %v233 = vsel %vm232, %v229, %v231
        %v234 = vsel %vm232, %v227, %v229
        %v235 = vsel %vm232, %v231, %v227
        %236 = vrot.lane.b32.xlu0 %v199, 1
        %v237 = vpop.permute.xlu0 %236
        %238 = vrot.lane.b32.xlu0 %v202, 1
        %v239 = vpop.permute.xlu0 %238
        %240 = vrot.lane.b32.xlu0 %v200, 1
        %v241 = vpop.permute.xlu0 %240
        %vm242 = vcmp.lt.s32.totalorder %v211, 1
        %v243 = vsel %vm242, %v239, %v241
        %v244 = vsel %vm242, %v237, %v239
        %v245 = vsel %vm242, %v241, %v237
        %246 = vrot.lane.b32.xlu0 %v199, 127
        %v247 = vpop.permute.xlu0 %246
        %248 = vrot.lane.b32.xlu0 %v202, 127
        %v249 = vpop.permute.xlu0 %248
        %250 = vrot.lane.b32.xlu0 %v200, 127
        %v251 = vpop.permute.xlu0 %250
        %vm252 = vcmp.lt.s32.totalorder %v211, 127
        %v253 = vsel %vm252, %v249, %v251
        %v254 = vsel %vm252, %v247, %v249
        %v255 = vsel %vm252, %v251, %v247
        %256 = vrot.lane.b32.xlu0 %v199, 111
        %v257 = vpop.permute.xlu0 %256
        %258 = vrot.lane.b32.xlu0 %v202, 111
        %v259 = vpop.permute.xlu0 %258
        %260 = vrot.lane.b32.xlu0 %v200, 111
        %v261 = vpop.permute.xlu0 %260
        %vm262 = vcmp.lt.s32.totalorder %v211, 111
        %v263 = vsel %vm262, %v259, %v261
        %v264 = vsel %vm262, %v257, %v259
        %v265 = vsel %vm262, %v261, %v257
        %266 = vrot.lane.b32.xlu0 %v199, 110
        %v267 = vpop.permute.xlu0 %266
        %268 = vrot.lane.b32.xlu0 %v202, 110
        %v269 = vpop.permute.xlu0 %268
        %270 = vrot.lane.b32.xlu0 %v200, 110
        %v271 = vpop.permute.xlu0 %270
        %vm272 = vcmp.lt.s32.totalorder %v211, 110
        %v273 = vsel %vm272, %v269, %v271
        %v274 = vsel %vm272, %v267, %v269
        %v275 = vsel %vm272, %v271, %v267
        %276 = vrot.lane.b32.xlu0 %v199, 109
        %v277 = vpop.permute.xlu0 %276
        %278 = vrot.lane.b32.xlu0 %v202, 109
        %v279 = vpop.permute.xlu0 %278
        %280 = vrot.lane.b32.xlu0 %v200, 109
        %v281 = vpop.permute.xlu0 %280
        %vm282 = vcmp.lt.s32.totalorder %v211, 109
        %v283 = vsel %vm282, %v279, %v281
        %v284 = vsel %vm282, %v277, %v279
        %v285 = vsel %vm282, %v281, %v277
        %v289 = vrot.slane %v225, 4
        %v290 = vrot.slane %v224, 4
        %v291 = vrot.slane %v223, 4
        %v298 = vrot.slane %v245, 4
        %v299 = vrot.slane %v244, 4
        %v300 = vrot.slane %v243, 4
        %v307 = vrot.slane %v254, 4
        %v308 = vrot.slane %v253, 4
        %v309 = vrot.slane %v255, 4
        %v316 = vrot.slane %v274, 4
        %v317 = vrot.slane %v273, 4
        %v318 = vrot.slane %v275, 4
        %vm322 = vcmask 1043456
        %v323 = vsel %vm322, %v215, %v289
        %v324 = vsel %vm322, %v214, %v290
        %v325 = vsel %vm322, %v213, %v291
        %v326 = vsel %vm322, %v235, %v298
        %v327 = vsel %vm322, %v234, %v299
        %v328 = vsel %vm322, %v233, %v300
        %v329 = vsel %vm322, %v199, %v307
        %v330 = vsel %vm322, %v202, %v308
        %v331 = vsel %vm322, %v200, %v309
        %v332 = vsel %vm322, %v264, %v316
        %v333 = vsel %vm322, %v263, %v317
        %v334 = vsel %vm322, %v265, %v318
        %336 = vset.pattern.permute.xlu0 0
        %337 = vperm.xlu0 %336, %v198
        %v338 = vpop.permute.xlu0 %337
        %vm340 = vcmask 293888
        %v342 = vsel %vm340, %v197, 0
        %v345 = vsel %vm322, %v284, 0
        %v348 = vsel %vm322, %v283, 0
        %v351 = vsel %vm322, %v285, 0
        %v353 = vand.u32 %v324, 4294901760
        %354 = vmatprep.subr.mxu0 %v353
        %v355 = vand.u32 %v323, 4294901760
        %356 = vmatpush1.msra.mxu0 %v355
        %v357 = vand.u32 %v327, 4294901760
        %358 = vmatprep.subr.mxu0 %v357
        %v359 = vand.u32 %v326, 4294901760
        %360 = vmatpush1.msra.mxu0 %v359
        %v361 = vand.u32 %v330, 4294901760
        %362 = vmatprep.subr.mxu0 %v361
        %v363 = vand.u32 %v329, 4294901760
        %364 = vmatpush1.msra.mxu0 %v363
        %v365 = vand.u32 %v333, 4294901760
        %366 = vmatprep.subr.mxu0 %v365
        %v367 = vand.u32 %v332, 4294901760
        %368 = vmatpush1.msra.mxu0 %v367
        %v369 = vand.u32 %v348, 4294901760
        %370 = vmatprep.subr.mxu0 %v369
        %v371 = vand.u32 %v345, 4294901760
        %372 = vmatpush1.msra.mxu0 %v371
        %373 = vmatprep.subr.mxu0 0.0
        %374 = vmatpush1.msra.mxu0 0.0
        %375 = vmatprep.subr.mxu0 0.0
        %376 = vmatpush1.msra.mxu0 0.0
        %377 = vmatprep.subr.mxu0 0.0
        %378 = vmatpush1.msra.mxu0 0.0
        %379 = vmatprep.subr.mxu0 0.0
        %380 = vmatpush1.msra.mxu0 0.0
        %381 = vmatprep.subr.mxu0 0.0
        %382 = vmatpush1.msra.mxu0 0.0
        %383 = vmatprep.subr.mxu0 0.0
        %384 = vmatpush1.msra.mxu0 0.0
        %385 = vmatprep.subr.mxu0 0.0
        %386 = vmatpush1.msra.mxu0 0.0
        %387 = vmatprep.subr.mxu0 0.0
        %388 = vmatpush1.msra.mxu0 0.0
        %389 = vmatprep.subr.mxu0 0.0
        %390 = vmatpush1.msra.mxu0 0.0
        %391 = vmatprep.subr.mxu0 0.0
        %392 = vmatpush1.msra.mxu0 0.0
        %393 = vmatprep.subr.mxu0 0.0
        %394 = vmatpush1.msra.mxu0 0.0
        %395 = vmatprep.subr.mxu0 0.0
        %396 = vmatpush1.msra.mxu0 0.0
        %397 = vmatprep.subr.mxu0 0.0
        %398 = vmatpush1.msra.mxu0 0.0
        %399 = vmatprep.subr.mxu0 0.0
        %400 = vmatpush1.msra.mxu0 0.0
        %401 = vmatprep.subr.mxu0 0.0
        %402 = vmatpush1.msra.mxu0 0.0
        %403 = vmatprep.subr.mxu0 0.0
        %404 = vmatpush1.msra.mxu0 0.0
        %405 = vmatprep.subr.mxu0 0.0
        %406 = vmatpush1.msra.mxu0 0.0
        %407 = vmatprep.subr.mxu0 0.0
        %408 = vmatpush1.msra.mxu0 0.0
        %409 = vmatprep.subr.mxu0 0.0
        %410 = vmatpush1.msra.mxu0 0.0
        %411 = vmatprep.subr.mxu0 0.0
        %412 = vmatpush1.msra.mxu0 0.0
        %413 = vmatprep.subr.mxu0 0.0
        %414 = vmatpush1.msra.mxu0 0.0
        %415 = vmatprep.subr.mxu0 0.0
        %416 = vmatpush1.msra.mxu0 0.0
        %417 = vmatprep.subr.mxu0 0.0
        %418 = vmatpush1.msra.mxu0 0.0
        %419 = vmatprep.subr.mxu0 0.0
        %420 = vmatpush1.msra.mxu0 0.0
        %421 = vmatprep.subr.mxu0 0.0
        %422 = vmatpush1.msra.mxu0 0.0
        %423 = vmatprep.subr.mxu0 0.0
        %424 = vmatpush1.msra.mxu0 0.0
        %425 = vmatprep.subr.mxu0 0.0
        %426 = vmatpush1.msra.mxu0 0.0
        %427 = vmatprep.mubr.f32.mxu0 0.0
        %v428 = vand.u32 %v342, 4294901760
        %v429 = vsub.f32 %v342, %v428
        %v430 = vand.u32 %v429, 4294901760
        %v431 = vsub.f32 %v429, %v430
        %v432 = vand.u32 %v431, 4294901760
        %433 = vmatmul.mubr.f32.gmra.mrb[0].mxu0 %v432
        %v434 = vpop.f32.mrb[0].mxu0
        %v435 = vadd.f32 %v338, %v434
        %v436 = vpop.f32.mrb[0].mxu0
        %v437 = vadd.f32 %v338, %v436
        %438 = vdwg.mxu0
        %v439 = vand.u32 %v324, 4294901760
        %v440 = vsub.f32 %v324, %v439
        %v441 = vand.u32 %v440, 4294901760
        %v442 = vsub.f32 %v440, %v441
        %v443 = vand.u32 %v442, 4294901760
        %444 = vmatprep.subr.mxu0 %v443
        %v445 = vand.u32 %v323, 4294901760
        %v446 = vsub.f32 %v323, %v445
        %v447 = vand.u32 %v446, 4294901760
        %v448 = vsub.f32 %v446, %v447
        %v449 = vand.u32 %v448, 4294901760
        %450 = vmatpush1.msra.mxu0 %v449
        %v451 = vand.u32 %v327, 4294901760
        %v452 = vsub.f32 %v327, %v451
        %v453 = vand.u32 %v452, 4294901760
        %v454 = vsub.f32 %v452, %v453
        %v455 = vand.u32 %v454, 4294901760
        %456 = vmatprep.subr.mxu0 %v455
        %v457 = vand.u32 %v326, 4294901760
        %v458 = vsub.f32 %v326, %v457
        %v459 = vand.u32 %v458, 4294901760
        %v460 = vsub.f32 %v458, %v459
        %v461 = vand.u32 %v460, 4294901760
        %462 = vmatpush1.msra.mxu0 %v461
        %v463 = vand.u32 %v330, 4294901760
        %v464 = vsub.f32 %v330, %v463
        %v465 = vand.u32 %v464, 4294901760
        %v466 = vsub.f32 %v464, %v465
        %v467 = vand.u32 %v466, 4294901760
        %468 = vmatprep.subr.mxu0 %v467
        %v469 = vand.u32 %v329, 4294901760
        %v470 = vsub.f32 %v329, %v469
        %v471 = vand.u32 %v470, 4294901760
        %v472 = vsub.f32 %v470, %v471
        %v473 = vand.u32 %v472, 4294901760
        %474 = vmatpush1.msra.mxu0 %v473
        %v475 = vand.u32 %v333, 4294901760
        %v476 = vsub.f32 %v333, %v475
        %v477 = vand.u32 %v476, 4294901760
        %v478 = vsub.f32 %v476, %v477
        %v479 = vand.u32 %v478, 4294901760
        %480 = vmatprep.subr.mxu0 %v479
        %v481 = vand.u32 %v332, 4294901760
        %v482 = vsub.f32 %v332, %v481
        %v483 = vand.u32 %v482, 4294901760
        %v484 = vsub.f32 %v482, %v483
        %v485 = vand.u32 %v484, 4294901760
        %486 = vmatpush1.msra.mxu0 %v485
        %v487 = vand.u32 %v348, 4294901760
        %v488 = vsub.f32 %v348, %v487
        %v489 = vand.u32 %v488, 4294901760
        %v490 = vsub.f32 %v488, %v489
        %v491 = vand.u32 %v490, 4294901760
        %492 = vmatprep.subr.mxu0 %v491
        %v493 = vand.u32 %v345, 4294901760
        %v494 = vsub.f32 %v345, %v493
        %v495 = vand.u32 %v494, 4294901760
        %v496 = vsub.f32 %v494, %v495
        %v497 = vand.u32 %v496, 4294901760
        %498 = vmatpush1.msra.mxu0 %v497
        %499 = vmatprep.subr.mxu0 0.0
        %500 = vmatpush1.msra.mxu0 0.0
        %501 = vmatprep.subr.mxu0 0.0
        %502 = vmatpush1.msra.mxu0 0.0
        %503 = vmatprep.subr.mxu0 0.0
        %504 = vmatpush1.msra.mxu0 0.0
        %505 = vmatprep.subr.mxu0 0.0
        %506 = vmatpush1.msra.mxu0 0.0
        %507 = vmatprep.subr.mxu0 0.0
        %508 = vmatpush1.msra.mxu0 0.0
        %509 = vmatprep.subr.mxu0 0.0
        %510 = vmatpush1.msra.mxu0 0.0
        %511 = vmatprep.subr.mxu0 0.0
        %512 = vmatpush1.msra.mxu0 0.0
        %513 = vmatprep.subr.mxu0 0.0
        %514 = vmatpush1.msra.mxu0 0.0
        %515 = vmatprep.subr.mxu0 0.0
        %516 = vmatpush1.msra.mxu0 0.0
        %517 = vmatprep.subr.mxu0 0.0
        %518 = vmatpush1.msra.mxu0 0.0
        %519 = vmatprep.subr.mxu0 0.0
        %520 = vmatpush1.msra.mxu0 0.0
        %521 = vmatprep.subr.mxu0 0.0
        %522 = vmatpush1.msra.mxu0 0.0
        %523 = vmatprep.subr.mxu0 0.0
        %524 = vmatpush1.msra.mxu0 0.0
        %525 = vmatprep.subr.mxu0 0.0
        %526 = vmatpush1.msra.mxu0 0.0
        %527 = vmatprep.subr.mxu0 0.0
        %528 = vmatpush1.msra.mxu0 0.0
        %529 = vmatprep.subr.mxu0 0.0
        %530 = vmatpush1.msra.mxu0 0.0
        %531 = vmatprep.subr.mxu0 0.0
        %532 = vmatpush1.msra.mxu0 0.0
        %533 = vmatprep.subr.mxu0 0.0
        %534 = vmatpush1.msra.mxu0 0.0
        %535 = vmatprep.subr.mxu0 0.0
        %536 = vmatpush1.msra.mxu0 0.0
        %537 = vmatprep.subr.mxu0 0.0
        %538 = vmatpush1.msra.mxu0 0.0
        %539 = vmatprep.subr.mxu0 0.0
        %540 = vmatpush1.msra.mxu0 0.0
        %541 = vmatprep.subr.mxu0 0.0
        %542 = vmatpush1.msra.mxu0 0.0
        %543 = vmatprep.subr.mxu0 0.0
        %544 = vmatpush1.msra.mxu0 0.0
        %545 = vmatprep.subr.mxu0 0.0
        %546 = vmatpush1.msra.mxu0 0.0
        %547 = vmatprep.subr.mxu0 0.0
        %548 = vmatpush1.msra.mxu0 0.0
        %549 = vmatprep.subr.mxu0 0.0
        %550 = vmatpush1.msra.mxu0 0.0
        %551 = vmatprep.subr.mxu0 0.0
        %552 = vmatpush1.msra.mxu0 0.0
        %553 = vmatprep.mubr.f32.mxu0 0.0
        %v554 = vand.u32 %v342, 4294901760
        %555 = vmatmul.mubr.f32.gmra.mrb[0].mxu0 %v554
        %v556 = vpop.f32.mrb[0].mxu0
        %v557 = vadd.f32 %v435, %v556
        %v558 = vpop.f32.mrb[0].mxu0
        %v559 = vadd.f32 %v437, %v558
        %560 = vdwg.mxu0
        %v561 = vand.u32 %v324, 4294901760
        %v562 = vsub.f32 %v324, %v561
        %563 = vmatprep.subr.mxu0 %v562
        %v564 = vand.u32 %v323, 4294901760
        %v565 = vsub.f32 %v323, %v564
        %566 = vmatpush1.msra.mxu0 %v565
        %v567 = vand.u32 %v327, 4294901760
        %v568 = vsub.f32 %v327, %v567
        %569 = vmatprep.subr.mxu0 %v568
        %v570 = vand.u32 %v326, 4294901760
        %v571 = vsub.f32 %v326, %v570
        %572 = vmatpush1.msra.mxu0 %v571
        %v573 = vand.u32 %v330, 4294901760
        %v574 = vsub.f32 %v330, %v573
        %575 = vmatprep.subr.mxu0 %v574
        %v576 = vand.u32 %v329, 4294901760
        %v577 = vsub.f32 %v329, %v576
        %578 = vmatpush1.msra.mxu0 %v577
        %v579 = vand.u32 %v333, 4294901760
        %v580 = vsub.f32 %v333, %v579
        %581 = vmatprep.subr.mxu0 %v580
        %v582 = vand.u32 %v332, 4294901760
        %v583 = vsub.f32 %v332, %v582
        %584 = vmatpush1.msra.mxu0 %v583
        %v585 = vand.u32 %v348, 4294901760
        %v586 = vsub.f32 %v348, %v585
        %587 = vmatprep.subr.mxu0 %v586
        %v588 = vand.u32 %v345, 4294901760
        %v589 = vsub.f32 %v345, %v588
        %590 = vmatpush1.msra.mxu0 %v589
        %591 = vmatprep.subr.mxu0 0.0
        %592 = vmatpush1.msra.mxu0 0.0
        %593 = vmatprep.subr.mxu0 0.0
        %594 = vmatpush1.msra.mxu0 0.0
        %595 = vmatprep.subr.mxu0 0.0
        %596 = vmatpush1.msra.mxu0 0.0
        %597 = vmatprep.subr.mxu0 0.0
        %598 = vmatpush1.msra.mxu0 0.0
        %599 = vmatprep.subr.mxu0 0.0
        %600 = vmatpush1.msra.mxu0 0.0
        %601 = vmatprep.subr.mxu0 0.0
        %602 = vmatpush1.msra.mxu0 0.0
        %603 = vmatprep.subr.mxu0 0.0
        %604 = vmatpush1.msra.mxu0 0.0
        %605 = vmatprep.subr.mxu0 0.0
        %606 = vmatpush1.msra.mxu0 0.0
        %607 = vmatprep.subr.mxu0 0.0
        %608 = vmatpush1.msra.mxu0 0.0
        %609 = vmatprep.subr.mxu0 0.0
        %610 = vmatpush1.msra.mxu0 0.0
        %611 = vmatprep.subr.mxu0 0.0
        %612 = vmatpush1.msra.mxu0 0.0
        %613 = vmatprep.subr.mxu0 0.0
        %614 = vmatpush1.msra.mxu0 0.0
        %615 = vmatprep.subr.mxu0 0.0
        %616 = vmatpush1.msra.mxu0 0.0
        %617 = vmatprep.subr.mxu0 0.0
        %618 = vmatpush1.msra.mxu0 0.0
        %619 = vmatprep.subr.mxu0 0.0
        %620 = vmatpush1.msra.mxu0 0.0
        %621 = vmatprep.subr.mxu0 0.0
        %622 = vmatpush1.msra.mxu0 0.0
        %623 = vmatprep.subr.mxu0 0.0
        %624 = vmatpush1.msra.mxu0 0.0
        %625 = vmatprep.subr.mxu0 0.0
        %626 = vmatpush1.msra.mxu0 0.0
        %627 = vmatprep.subr.mxu0 0.0
        %628 = vmatpush1.msra.mxu0 0.0
        %629 = vmatprep.subr.mxu0 0.0
        %630 = vmatpush1.msra.mxu0 0.0
        %631 = vmatprep.subr.mxu0 0.0
        %632 = vmatpush1.msra.mxu0 0.0
        %633 = vmatprep.subr.mxu0 0.0
        %634 = vmatpush1.msra.mxu0 0.0
        %635 = vmatprep.subr.mxu0 0.0
        %636 = vmatpush1.msra.mxu0 0.0
        %637 = vmatprep.subr.mxu0 0.0
        %638 = vmatpush1.msra.mxu0 0.0
        %639 = vmatprep.subr.mxu0 0.0
        %640 = vmatpush1.msra.mxu0 0.0
        %641 = vmatprep.subr.mxu0 0.0
        %642 = vmatpush1.msra.mxu0 0.0
        %643 = vmatprep.subr.mxu0 0.0
        %644 = vmatpush1.msra.mxu0 0.0
        %645 = vmatprep.mubr.f32.mxu0 0.0
        %v646 = vand.u32 %v342, 4294901760
        %v647 = vsub.f32 %v342, %v646
        %648 = vmatmul.mubr.f32.gmra.mrb[0].mxu0 %v647
        %v649 = vpop.f32.mrb[0].mxu0
        %v650 = vadd.f32 %v557, %v649
        %v651 = vpop.f32.mrb[0].mxu0
        %v652 = vadd.f32 %v559, %v651
        %653 = vdwg.mxu0
        %v654 = vand.u32 %v324, 4294901760
        %655 = vmatprep.subr.mxu0 %v654
        %v656 = vand.u32 %v323, 4294901760
        %657 = vmatpush1.msra.mxu0 %v656
        %v658 = vand.u32 %v327, 4294901760
        %659 = vmatprep.subr.mxu0 %v658
        %v660 = vand.u32 %v326, 4294901760
        %661 = vmatpush1.msra.mxu0 %v660
        %v662 = vand.u32 %v330, 4294901760
        %663 = vmatprep.subr.mxu0 %v662
        %v664 = vand.u32 %v329, 4294901760
        %665 = vmatpush1.msra.mxu0 %v664
        %v666 = vand.u32 %v333, 4294901760
        %667 = vmatprep.subr.mxu0 %v666
        %v668 = vand.u32 %v332, 4294901760
        %669 = vmatpush1.msra.mxu0 %v668
        %v670 = vand.u32 %v348, 4294901760
        %671 = vmatprep.subr.mxu0 %v670
        %v672 = vand.u32 %v345, 4294901760
        %673 = vmatpush1.msra.mxu0 %v672
        %674 = vmatprep.subr.mxu0 0.0
        %675 = vmatpush1.msra.mxu0 0.0
        %676 = vmatprep.subr.mxu0 0.0
        %677 = vmatpush1.msra.mxu0 0.0
        %678 = vmatprep.subr.mxu0 0.0
        %679 = vmatpush1.msra.mxu0 0.0
        %680 = vmatprep.subr.mxu0 0.0
        %681 = vmatpush1.msra.mxu0 0.0
        %682 = vmatprep.subr.mxu0 0.0
        %683 = vmatpush1.msra.mxu0 0.0
        %684 = vmatprep.subr.mxu0 0.0
        %685 = vmatpush1.msra.mxu0 0.0
        %686 = vmatprep.subr.mxu0 0.0
        %687 = vmatpush1.msra.mxu0 0.0
        %688 = vmatprep.subr.mxu0 0.0
        %689 = vmatpush1.msra.mxu0 0.0
        %690 = vmatprep.subr.mxu0 0.0
        %691 = vmatpush1.msra.mxu0 0.0
        %692 = vmatprep.subr.mxu0 0.0
        %693 = vmatpush1.msra.mxu0 0.0
        %694 = vmatprep.subr.mxu0 0.0
        %695 = vmatpush1.msra.mxu0 0.0
        %696 = vmatprep.subr.mxu0 0.0
        %697 = vmatpush1.msra.mxu0 0.0
        %698 = vmatprep.subr.mxu0 0.0
        %699 = vmatpush1.msra.mxu0 0.0
        %700 = vmatprep.subr.mxu0 0.0
        %701 = vmatpush1.msra.mxu0 0.0
        %702 = vmatprep.subr.mxu0 0.0
        %703 = vmatpush1.msra.mxu0 0.0
        %704 = vmatprep.subr.mxu0 0.0
        %705 = vmatpush1.msra.mxu0 0.0
        %706 = vmatprep.subr.mxu0 0.0
        %707 = vmatpush1.msra.mxu0 0.0
        %708 = vmatprep.subr.mxu0 0.0
        %709 = vmatpush1.msra.mxu0 0.0
        %710 = vmatprep.subr.mxu0 0.0
        %711 = vmatpush1.msra.mxu0 0.0
        %712 = vmatprep.subr.mxu0 0.0
        %713 = vmatpush1.msra.mxu0 0.0
        %714 = vmatprep.subr.mxu0 0.0
        %715 = vmatpush1.msra.mxu0 0.0
        %716 = vmatprep.subr.mxu0 0.0
        %717 = vmatpush1.msra.mxu0 0.0
        %718 = vmatprep.subr.mxu0 0.0
        %719 = vmatpush1.msra.mxu0 0.0
        %720 = vmatprep.subr.mxu0 0.0
        %721 = vmatpush1.msra.mxu0 0.0
        %722 = vmatprep.subr.mxu0 0.0
        %723 = vmatpush1.msra.mxu0 0.0
        %724 = vmatprep.subr.mxu0 0.0
        %725 = vmatpush1.msra.mxu0 0.0
        %726 = vmatprep.subr.mxu0 0.0
        %727 = vmatpush1.msra.mxu0 0.0
        %728 = vmatprep.mubr.f32.mxu0 0.0
        %v729 = vand.u32 %v342, 4294901760
        %v730 = vsub.f32 %v342, %v729
        %v731 = vand.u32 %v730, 4294901760
        %732 = vmatmul.mubr.f32.gmra.mrb[0].mxu0 %v731
        %v733 = vpop.f32.mrb[0].mxu0
        %v734 = vadd.f32 %v650, %v733
        %v735 = vpop.f32.mrb[0].mxu0
        %v736 = vadd.f32 %v652, %v735
        %737 = vdwg.mxu0
        %v738 = vand.u32 %v324, 4294901760
        %v739 = vsub.f32 %v324, %v738
        %v740 = vand.u32 %v739, 4294901760
        %741 = vmatprep.subr.mxu0 %v740
        %v742 = vand.u32 %v323, 4294901760
        %v743 = vsub.f32 %v323, %v742
        %v744 = vand.u32 %v743, 4294901760
        %745 = vmatpush1.msra.mxu0 %v744
        %v746 = vand.u32 %v327, 4294901760
        %v747 = vsub.f32 %v327, %v746
        %v748 = vand.u32 %v747, 4294901760
        %749 = vmatprep.subr.mxu0 %v748
        %v750 = vand.u32 %v326, 4294901760
        %v751 = vsub.f32 %v326, %v750
        %v752 = vand.u32 %v751, 4294901760
        %753 = vmatpush1.msra.mxu0 %v752
        %v754 = vand.u32 %v330, 4294901760
        %v755 = vsub.f32 %v330, %v754
        %v756 = vand.u32 %v755, 4294901760
        %757 = vmatprep.subr.mxu0 %v756
        %v758 = vand.u32 %v329, 4294901760
        %v759 = vsub.f32 %v329, %v758
        %v760 = vand.u32 %v759, 4294901760
        %761 = vmatpush1.msra.mxu0 %v760
        %v762 = vand.u32 %v333, 4294901760
        %v763 = vsub.f32 %v333, %v762
        %v764 = vand.u32 %v763, 4294901760
        %765 = vmatprep.subr.mxu0 %v764
        %v766 = vand.u32 %v332, 4294901760
        %v767 = vsub.f32 %v332, %v766
        %v768 = vand.u32 %v767, 4294901760
        %769 = vmatpush1.msra.mxu0 %v768
        %v770 = vand.u32 %v348, 4294901760
        %v771 = vsub.f32 %v348, %v770
        %v772 = vand.u32 %v771, 4294901760
        %773 = vmatprep.subr.mxu0 %v772
        %v774 = vand.u32 %v345, 4294901760
        %v775 = vsub.f32 %v345, %v774
        %v776 = vand.u32 %v775, 4294901760
        %777 = vmatpush1.msra.mxu0 %v776
        %778 = vmatprep.subr.mxu0 0.0
        %779 = vmatpush1.msra.mxu0 0.0
        %780 = vmatprep.subr.mxu0 0.0
        %781 = vmatpush1.msra.mxu0 0.0
        %782 = vmatprep.subr.mxu0 0.0
        %783 = vmatpush1.msra.mxu0 0.0
        %784 = vmatprep.subr.mxu0 0.0
        %785 = vmatpush1.msra.mxu0 0.0
        %786 = vmatprep.subr.mxu0 0.0
        %787 = vmatpush1.msra.mxu0 0.0
        %788 = vmatprep.subr.mxu0 0.0
        %789 = vmatpush1.msra.mxu0 0.0
        %790 = vmatprep.subr.mxu0 0.0
        %791 = vmatpush1.msra.mxu0 0.0
        %792 = vmatprep.subr.mxu0 0.0
        %793 = vmatpush1.msra.mxu0 0.0
        %794 = vmatprep.subr.mxu0 0.0
        %795 = vmatpush1.msra.mxu0 0.0
        %796 = vmatprep.subr.mxu0 0.0
        %797 = vmatpush1.msra.mxu0 0.0
        %798 = vmatprep.subr.mxu0 0.0
        %799 = vmatpush1.msra.mxu0 0.0
        %800 = vmatprep.subr.mxu0 0.0
        %801 = vmatpush1.msra.mxu0 0.0
        %802 = vmatprep.subr.mxu0 0.0
        %803 = vmatpush1.msra.mxu0 0.0
        %804 = vmatprep.subr.mxu0 0.0
        %805 = vmatpush1.msra.mxu0 0.0
        %806 = vmatprep.subr.mxu0 0.0
        %807 = vmatpush1.msra.mxu0 0.0
        %808 = vmatprep.subr.mxu0 0.0
        %809 = vmatpush1.msra.mxu0 0.0
        %810 = vmatprep.subr.mxu0 0.0
        %811 = vmatpush1.msra.mxu0 0.0
        %812 = vmatprep.subr.mxu0 0.0
        %813 = vmatpush1.msra.mxu0 0.0
        %814 = vmatprep.subr.mxu0 0.0
        %815 = vmatpush1.msra.mxu0 0.0
        %816 = vmatprep.subr.mxu0 0.0
        %817 = vmatpush1.msra.mxu0 0.0
        %818 = vmatprep.subr.mxu0 0.0
        %819 = vmatpush1.msra.mxu0 0.0
        %820 = vmatprep.subr.mxu0 0.0
        %821 = vmatpush1.msra.mxu0 0.0
        %822 = vmatprep.subr.mxu0 0.0
        %823 = vmatpush1.msra.mxu0 0.0
        %824 = vmatprep.subr.mxu0 0.0
        %825 = vmatpush1.msra.mxu0 0.0
        %826 = vmatprep.subr.mxu0 0.0
        %827 = vmatpush1.msra.mxu0 0.0
        %828 = vmatprep.subr.mxu0 0.0
        %829 = vmatpush1.msra.mxu0 0.0
        %830 = vmatprep.subr.mxu0 0.0
        %831 = vmatpush1.msra.mxu0 0.0
        %832 = vmatprep.mubr.f32.mxu0 0.0
        %v833 = vand.u32 %v342, 4294901760
        %834 = vmatmul.mubr.f32.gmra.mrb[0].mxu0 %v833
        %v835 = vpop.f32.mrb[0].mxu0
        %v836 = vadd.f32 %v734, %v835
        %v837 = vpop.f32.mrb[0].mxu0
        %v838 = vadd.f32 %v736, %v837
        %839 = vdwg.mxu0
        %v840 = vand.u32 %v324, 4294901760
        %841 = vmatprep.subr.mxu0 %v840
        %v842 = vand.u32 %v323, 4294901760
        %843 = vmatpush1.msra.mxu0 %v842
        %v844 = vand.u32 %v327, 4294901760
        %845 = vmatprep.subr.mxu0 %v844
        %v846 = vand.u32 %v326, 4294901760
        %847 = vmatpush1.msra.mxu0 %v846
        %v848 = vand.u32 %v330, 4294901760
        %849 = vmatprep.subr.mxu0 %v848
        %v850 = vand.u32 %v329, 4294901760
        %851 = vmatpush1.msra.mxu0 %v850
        %v852 = vand.u32 %v333, 4294901760
        %853 = vmatprep.subr.mxu0 %v852
        %v854 = vand.u32 %v332, 4294901760
        %855 = vmatpush1.msra.mxu0 %v854
        %v856 = vand.u32 %v348, 4294901760
        %857 = vmatprep.subr.mxu0 %v856
        %v858 = vand.u32 %v345, 4294901760
        %859 = vmatpush1.msra.mxu0 %v858
        %860 = vmatprep.subr.mxu0 0.0
        %861 = vmatpush1.msra.mxu0 0.0
        %862 = vmatprep.subr.mxu0 0.0
        %863 = vmatpush1.msra.mxu0 0.0
        %864 = vmatprep.subr.mxu0 0.0
        %865 = vmatpush1.msra.mxu0 0.0
        %866 = vmatprep.subr.mxu0 0.0
        %867 = vmatpush1.msra.mxu0 0.0
        %868 = vmatprep.subr.mxu0 0.0
        %869 = vmatpush1.msra.mxu0 0.0
        %870 = vmatprep.subr.mxu0 0.0
        %871 = vmatpush1.msra.mxu0 0.0
        %872 = vmatprep.subr.mxu0 0.0
        %873 = vmatpush1.msra.mxu0 0.0
        %874 = vmatprep.subr.mxu0 0.0
        %875 = vmatpush1.msra.mxu0 0.0
        %876 = vmatprep.subr.mxu0 0.0
        %877 = vmatpush1.msra.mxu0 0.0
        %878 = vmatprep.subr.mxu0 0.0
        %879 = vmatpush1.msra.mxu0 0.0
        %880 = vmatprep.subr.mxu0 0.0
        %881 = vmatpush1.msra.mxu0 0.0
        %882 = vmatprep.subr.mxu0 0.0
        %883 = vmatpush1.msra.mxu0 0.0
        %884 = vmatprep.subr.mxu0 0.0
        %885 = vmatpush1.msra.mxu0 0.0
        %886 = vmatprep.subr.mxu0 0.0
        %887 = vmatpush1.msra.mxu0 0.0
        %888 = vmatprep.subr.mxu0 0.0
        %889 = vmatpush1.msra.mxu0 0.0
        %890 = vmatprep.subr.mxu0 0.0
        %891 = vmatpush1.msra.mxu0 0.0
        %892 = vmatprep.subr.mxu0 0.0
        %893 = vmatpush1.msra.mxu0 0.0
        %894 = vmatprep.subr.mxu0 0.0
        %895 = vmatpush1.msra.mxu0 0.0
        %896 = vmatprep.subr.mxu0 0.0
        %897 = vmatpush1.msra.mxu0 0.0
        %898 = vmatprep.subr.mxu0 0.0
        %899 = vmatpush1.msra.mxu0 0.0
        %900 = vmatprep.subr.mxu0 0.0
        %901 = vmatpush1.msra.mxu0 0.0
        %902 = vmatprep.subr.mxu0 0.0
        %903 = vmatpush1.msra.mxu0 0.0
        %904 = vmatprep.subr.mxu0 0.0
        %905 = vmatpush1.msra.mxu0 0.0
        %906 = vmatprep.subr.mxu0 0.0
        %907 = vmatpush1.msra.mxu0 0.0
        %908 = vmatprep.subr.mxu0 0.0
        %909 = vmatpush1.msra.mxu0 0.0
        %910 = vmatprep.subr.mxu0 0.0
        %911 = vmatpush1.msra.mxu0 0.0
        %912 = vmatprep.subr.mxu0 0.0
        %913 = vmatpush1.msra.mxu0 0.0
        %914 = vmatprep.mubr.f32.mxu0 0.0
        %v915 = vand.u32 %v342, 4294901760
        %916 = vmatmul.mubr.f32.gmra.mrb[0].mxu0 %v915
        %v917 = vpop.f32.mrb[0].mxu0
        %v918 = vadd.f32 %v836, %v917
        %v919 = vpop.f32.mrb[0].mxu0
        %v920 = vadd.f32 %v838, %v919
        %921 = vdwg.mxu0
        %922 = vmatprep.subr.mxu0 0.0
        %v923 = vand.u32 %v325, 4294901760
        %924 = vmatpush1.msra.mxu0 %v923
        %925 = vmatprep.subr.mxu0 0.0
        %v926 = vand.u32 %v328, 4294901760
        %927 = vmatpush1.msra.mxu0 %v926
        %928 = vmatprep.subr.mxu0 0.0
        %v929 = vand.u32 %v331, 4294901760
        %930 = vmatpush1.msra.mxu0 %v929
        %931 = vmatprep.subr.mxu0 0.0
        %v932 = vand.u32 %v334, 4294901760
        %933 = vmatpush1.msra.mxu0 %v932
        %934 = vmatprep.subr.mxu0 0.0
        %v935 = vand.u32 %v351, 4294901760
        %936 = vmatpush1.msra.mxu0 %v935
        %937 = vmatprep.subr.mxu0 0.0
        %938 = vmatpush1.msra.mxu0 0.0
        %939 = vmatprep.subr.mxu0 0.0
        %940 = vmatpush1.msra.mxu0 0.0
        %941 = vmatprep.subr.mxu0 0.0
        %942 = vmatpush1.msra.mxu0 0.0
        %943 = vmatprep.subr.mxu0 0.0
        %944 = vmatpush1.msra.mxu0 0.0
        %945 = vmatprep.subr.mxu0 0.0
        %946 = vmatpush1.msra.mxu0 0.0
        %947 = vmatprep.subr.mxu0 0.0
        %948 = vmatpush1.msra.mxu0 0.0
        %949 = vmatprep.subr.mxu0 0.0
        %950 = vmatpush1.msra.mxu0 0.0
        %951 = vmatprep.subr.mxu0 0.0
        %952 = vmatpush1.msra.mxu0 0.0
        %953 = vmatprep.subr.mxu0 0.0
        %954 = vmatpush1.msra.mxu0 0.0
        %955 = vmatprep.subr.mxu0 0.0
        %956 = vmatpush1.msra.mxu0 0.0
        %957 = vmatprep.subr.mxu0 0.0
        %958 = vmatpush1.msra.mxu0 0.0
        %959 = vmatprep.subr.mxu0 0.0
        %960 = vmatpush1.msra.mxu0 0.0
        %961 = vmatprep.subr.mxu0 0.0
        %962 = vmatpush1.msra.mxu0 0.0
        %963 = vmatprep.subr.mxu0 0.0
        %964 = vmatpush1.msra.mxu0 0.0
        %965 = vmatprep.subr.mxu0 0.0
        %966 = vmatpush1.msra.mxu0 0.0
        %967 = vmatprep.subr.mxu0 0.0
        %968 = vmatpush1.msra.mxu0 0.0
        %969 = vmatprep.subr.mxu0 0.0
        %970 = vmatpush1.msra.mxu0 0.0
        %971 = vmatprep.subr.mxu0 0.0
        %972 = vmatpush1.msra.mxu0 0.0
        %973 = vmatprep.subr.mxu0 0.0
        %974 = vmatpush1.msra.mxu0 0.0
        %975 = vmatprep.subr.mxu0 0.0
        %976 = vmatpush1.msra.mxu0 0.0
        %977 = vmatprep.subr.mxu0 0.0
        %978 = vmatpush1.msra.mxu0 0.0
        %979 = vmatprep.subr.mxu0 0.0
        %980 = vmatpush1.msra.mxu0 0.0
        %981 = vmatprep.subr.mxu0 0.0
        %982 = vmatpush1.msra.mxu0 0.0
        %983 = vmatprep.subr.mxu0 0.0
        %984 = vmatpush1.msra.mxu0 0.0
        %985 = vmatprep.subr.mxu0 0.0
        %986 = vmatpush1.msra.mxu0 0.0
        %987 = vmatprep.subr.mxu0 0.0
        %988 = vmatpush1.msra.mxu0 0.0
        %989 = vmatprep.subr.mxu0 0.0
        %990 = vmatpush1.msra.mxu0 0.0
        %991 = vmatprep.mubr.f32.mxu0 0.0
        %v992 = vand.u32 %v342, 4294901760
        %v993 = vsub.f32 %v342, %v992
        %v994 = vand.u32 %v993, 4294901760
        %v995 = vsub.f32 %v993, %v994
        %v996 = vand.u32 %v995, 4294901760
        %997 = vmatmul.mubr.f32.gmra.mrb[0].mxu0 %v996
        %v998 = vpop.f32.mrb[0].mxu0
        %v999 = vadd.f32 %v338, %v998
        %v1000 = vpop.f32.mrb[0].mxu0
        %1001 = vdwg.mxu0
        %1002 = vmatprep.subr.mxu0 0.0
        %v1003 = vand.u32 %v325, 4294901760
        %v1004 = vsub.f32 %v325, %v1003
        %v1005 = vand.u32 %v1004, 4294901760
        %v1006 = vsub.f32 %v1004, %v1005
        %v1007 = vand.u32 %v1006, 4294901760
        %1008 = vmatpush1.msra.mxu0 %v1007
        %1009 = vmatprep.subr.mxu0 0.0
        %v1010 = vand.u32 %v328, 4294901760
        %v1011 = vsub.f32 %v328, %v1010
        %v1012 = vand.u32 %v1011, 4294901760
        %v1013 = vsub.f32 %v1011, %v1012
        %v1014 = vand.u32 %v1013, 4294901760
        %1015 = vmatpush1.msra.mxu0 %v1014
        %1016 = vmatprep.subr.mxu0 0.0
        %v1017 = vand.u32 %v331, 4294901760
        %v1018 = vsub.f32 %v331, %v1017
        %v1019 = vand.u32 %v1018, 4294901760
        %v1020 = vsub.f32 %v1018, %v1019
        %v1021 = vand.u32 %v1020, 4294901760
        %1022 = vmatpush1.msra.mxu0 %v1021
        %1023 = vmatprep.subr.mxu0 0.0
        %v1024 = vand.u32 %v334, 4294901760
        %v1025 = vsub.f32 %v334, %v1024
        %v1026 = vand.u32 %v1025, 4294901760
        %v1027 = vsub.f32 %v1025, %v1026
        %v1028 = vand.u32 %v1027, 4294901760
        %1029 = vmatpush1.msra.mxu0 %v1028
        %1030 = vmatprep.subr.mxu0 0.0
        %v1031 = vand.u32 %v351, 4294901760
        %v1032 = vsub.f32 %v351, %v1031
        %v1033 = vand.u32 %v1032, 4294901760
        %v1034 = vsub.f32 %v1032, %v1033
        %v1035 = vand.u32 %v1034, 4294901760
        %1036 = vmatpush1.msra.mxu0 %v1035
        %1037 = vmatprep.subr.mxu0 0.0
        %1038 = vmatpush1.msra.mxu0 0.0
        %1039 = vmatprep.subr.mxu0 0.0
        %1040 = vmatpush1.msra.mxu0 0.0
        %1041 = vmatprep.subr.mxu0 0.0
        %1042 = vmatpush1.msra.mxu0 0.0
        %1043 = vmatprep.subr.mxu0 0.0
        %1044 = vmatpush1.msra.mxu0 0.0
        %1045 = vmatprep.subr.mxu0 0.0
        %1046 = vmatpush1.msra.mxu0 0.0
        %1047 = vmatprep.subr.mxu0 0.0
        %1048 = vmatpush1.msra.mxu0 0.0
        %1049 = vmatprep.subr.mxu0 0.0
        %1050 = vmatpush1.msra.mxu0 0.0
        %1051 = vmatprep.subr.mxu0 0.0
        %1052 = vmatpush1.msra.mxu0 0.0
        %1053 = vmatprep.subr.mxu0 0.0
        %1054 = vmatpush1.msra.mxu0 0.0
        %1055 = vmatprep.subr.mxu0 0.0
        %1056 = vmatpush1.msra.mxu0 0.0
        %1057 = vmatprep.subr.mxu0 0.0
        %1058 = vmatpush1.msra.mxu0 0.0
        %1059 = vmatprep.subr.mxu0 0.0
        %1060 = vmatpush1.msra.mxu0 0.0
        %1061 = vmatprep.subr.mxu0 0.0
        %1062 = vmatpush1.msra.mxu0 0.0
        %1063 = vmatprep.subr.mxu0 0.0
        %1064 = vmatpush1.msra.mxu0 0.0
        %1065 = vmatprep.subr.mxu0 0.0
        %1066 = vmatpush1.msra.mxu0 0.0
        %1067 = vmatprep.subr.mxu0 0.0
        %1068 = vmatpush1.msra.mxu0 0.0
        %1069 = vmatprep.subr.mxu0 0.0
        %1070 = vmatpush1.msra.mxu0 0.0
        %1071 = vmatprep.subr.mxu0 0.0
        %1072 = vmatpush1.msra.mxu0 0.0
        %1073 = vmatprep.subr.mxu0 0.0
        %1074 = vmatpush1.msra.mxu0 0.0
        %1075 = vmatprep.subr.mxu0 0.0
        %1076 = vmatpush1.msra.mxu0 0.0
        %1077 = vmatprep.subr.mxu0 0.0
        %1078 = vmatpush1.msra.mxu0 0.0
        %1079 = vmatprep.subr.mxu0 0.0
        %1080 = vmatpush1.msra.mxu0 0.0
        %1081 = vmatprep.subr.mxu0 0.0
        %1082 = vmatpush1.msra.mxu0 0.0
        %1083 = vmatprep.subr.mxu0 0.0
        %1084 = vmatpush1.msra.mxu0 0.0
        %1085 = vmatprep.subr.mxu0 0.0
        %1086 = vmatpush1.msra.mxu0 0.0
        %1087 = vmatprep.subr.mxu0 0.0
        %1088 = vmatpush1.msra.mxu0 0.0
        %1089 = vmatprep.subr.mxu0 0.0
        %1090 = vmatpush1.msra.mxu0 0.0
        %1091 = vmatprep.mubr.f32.mxu0 0.0
        %v1092 = vand.u32 %v342, 4294901760
        %1093 = vmatmul.mubr.f32.gmra.mrb[0].mxu0 %v1092
        %v1094 = vpop.f32.mrb[0].mxu0
        %v1095 = vadd.f32 %v999, %v1094
        %v1096 = vpop.f32.mrb[0].mxu0
        %1097 = vdwg.mxu0
        %1098 = vmatprep.subr.mxu0 0.0
        %v1099 = vand.u32 %v325, 4294901760
        %v1100 = vsub.f32 %v325, %v1099
        %1101 = vmatpush1.msra.mxu0 %v1100
        %1102 = vmatprep.subr.mxu0 0.0
        %v1103 = vand.u32 %v328, 4294901760
        %v1104 = vsub.f32 %v328, %v1103
        %1105 = vmatpush1.msra.mxu0 %v1104
        %1106 = vmatprep.subr.mxu0 0.0
        %v1107 = vand.u32 %v331, 4294901760
        %v1108 = vsub.f32 %v331, %v1107
        %1109 = vmatpush1.msra.mxu0 %v1108
        %1110 = vmatprep.subr.mxu0 0.0
        %v1111 = vand.u32 %v334, 4294901760
        %v1112 = vsub.f32 %v334, %v1111
        %1113 = vmatpush1.msra.mxu0 %v1112
        %1114 = vmatprep.subr.mxu0 0.0
        %v1115 = vand.u32 %v351, 4294901760
        %v1116 = vsub.f32 %v351, %v1115
        %1117 = vmatpush1.msra.mxu0 %v1116
        %1118 = vmatprep.subr.mxu0 0.0
        %1119 = vmatpush1.msra.mxu0 0.0
        %1120 = vmatprep.subr.mxu0 0.0
        %1121 = vmatpush1.msra.mxu0 0.0
        %1122 = vmatprep.subr.mxu0 0.0
        %1123 = vmatpush1.msra.mxu0 0.0
        %1124 = vmatprep.subr.mxu0 0.0
        %1125 = vmatpush1.msra.mxu0 0.0
        %1126 = vmatprep.subr.mxu0 0.0
        %1127 = vmatpush1.msra.mxu0 0.0
        %1128 = vmatprep.subr.mxu0 0.0
        %1129 = vmatpush1.msra.mxu0 0.0
        %1130 = vmatprep.subr.mxu0 0.0
        %1131 = vmatpush1.msra.mxu0 0.0
        %1132 = vmatprep.subr.mxu0 0.0
        %1133 = vmatpush1.msra.mxu0 0.0
        %1134 = vmatprep.subr.mxu0 0.0
        %1135 = vmatpush1.msra.mxu0 0.0
        %1136 = vmatprep.subr.mxu0 0.0
        %1137 = vmatpush1.msra.mxu0 0.0
        %1138 = vmatprep.subr.mxu0 0.0
        %1139 = vmatpush1.msra.mxu0 0.0
        %1140 = vmatprep.subr.mxu0 0.0
        %1141 = vmatpush1.msra.mxu0 0.0
        %1142 = vmatprep.subr.mxu0 0.0
        %1143 = vmatpush1.msra.mxu0 0.0
        %1144 = vmatprep.subr.mxu0 0.0
        %1145 = vmatpush1.msra.mxu0 0.0
        %1146 = vmatprep.subr.mxu0 0.0
        %1147 = vmatpush1.msra.mxu0 0.0
        %1148 = vmatprep.subr.mxu0 0.0
        %1149 = vmatpush1.msra.mxu0 0.0
        %1150 = vmatprep.subr.mxu0 0.0
        %1151 = vmatpush1.msra.mxu0 0.0
        %1152 = vmatprep.subr.mxu0 0.0
        %1153 = vmatpush1.msra.mxu0 0.0
        %1154 = vmatprep.subr.mxu0 0.0
        %1155 = vmatpush1.msra.mxu0 0.0
        %1156 = vmatprep.subr.mxu0 0.0
        %1157 = vmatpush1.msra.mxu0 0.0
        %1158 = vmatprep.subr.mxu0 0.0
        %1159 = vmatpush1.msra.mxu0 0.0
        %1160 = vmatprep.subr.mxu0 0.0
        %1161 = vmatpush1.msra.mxu0 0.0
        %1162 = vmatprep.subr.mxu0 0.0
        %1163 = vmatpush1.msra.mxu0 0.0
        %1164 = vmatprep.subr.mxu0 0.0
        %1165 = vmatpush1.msra.mxu0 0.0
        %1166 = vmatprep.subr.mxu0 0.0
        %1167 = vmatpush1.msra.mxu0 0.0
        %1168 = vmatprep.subr.mxu0 0.0
        %1169 = vmatpush1.msra.mxu0 0.0
        %1170 = vmatprep.subr.mxu0 0.0
        %1171 = vmatpush1.msra.mxu0 0.0
        %1172 = vmatprep.mubr.f32.mxu0 0.0
        %v1173 = vand.u32 %v342, 4294901760
        %v1174 = vsub.f32 %v342, %v1173
        %1175 = vmatmul.mubr.f32.gmra.mrb[0].mxu0 %v1174
        %v1176 = vpop.f32.mrb[0].mxu0
        %v1177 = vadd.f32 %v1095, %v1176
        %v1178 = vpop.f32.mrb[0].mxu0
        %1179 = vdwg.mxu0
        %1180 = vmatprep.subr.mxu0 0.0
        %v1181 = vand.u32 %v325, 4294901760
        %1182 = vmatpush1.msra.mxu0 %v1181
        %1183 = vmatprep.subr.mxu0 0.0
        %v1184 = vand.u32 %v328, 4294901760
        %1185 = vmatpush1.msra.mxu0 %v1184
        %1186 = vmatprep.subr.mxu0 0.0
        %v1187 = vand.u32 %v331, 4294901760
        %1188 = vmatpush1.msra.mxu0 %v1187
        %1189 = vmatprep.subr.mxu0 0.0
        %v1190 = vand.u32 %v334, 4294901760
        %1191 = vmatpush1.msra.mxu0 %v1190
        %1192 = vmatprep.subr.mxu0 0.0
        %v1193 = vand.u32 %v351, 4294901760
        %1194 = vmatpush1.msra.mxu0 %v1193
        %1195 = vmatprep.subr.mxu0 0.0
        %1196 = vmatpush1.msra.mxu0 0.0
        %1197 = vmatprep.subr.mxu0 0.0
        %1198 = vmatpush1.msra.mxu0 0.0
        %1199 = vmatprep.subr.mxu0 0.0
        %1200 = vmatpush1.msra.mxu0 0.0
        %1201 = vmatprep.subr.mxu0 0.0
        %1202 = vmatpush1.msra.mxu0 0.0
        %1203 = vmatprep.subr.mxu0 0.0
        %1204 = vmatpush1.msra.mxu0 0.0
        %1205 = vmatprep.subr.mxu0 0.0
        %1206 = vmatpush1.msra.mxu0 0.0
        %1207 = vmatprep.subr.mxu0 0.0
        %1208 = vmatpush1.msra.mxu0 0.0
        %1209 = vmatprep.subr.mxu0 0.0
        %1210 = vmatpush1.msra.mxu0 0.0
        %1211 = vmatprep.subr.mxu0 0.0
        %1212 = vmatpush1.msra.mxu0 0.0
        %1213 = vmatprep.subr.mxu0 0.0
        %1214 = vmatpush1.msra.mxu0 0.0
        %1215 = vmatprep.subr.mxu0 0.0
        %1216 = vmatpush1.msra.mxu0 0.0
        %1217 = vmatprep.subr.mxu0 0.0
        %1218 = vmatpush1.msra.mxu0 0.0
        %1219 = vmatprep.subr.mxu0 0.0
        %1220 = vmatpush1.msra.mxu0 0.0
        %1221 = vmatprep.subr.mxu0 0.0
        %1222 = vmatpush1.msra.mxu0 0.0
        %1223 = vmatprep.subr.mxu0 0.0
        %1224 = vmatpush1.msra.mxu0 0.0
        %1225 = vmatprep.subr.mxu0 0.0
        %1226 = vmatpush1.msra.mxu0 0.0
        %1227 = vmatprep.subr.mxu0 0.0
        %1228 = vmatpush1.msra.mxu0 0.0
        %1229 = vmatprep.subr.mxu0 0.0
        %1230 = vmatpush1.msra.mxu0 0.0
        %1231 = vmatprep.subr.mxu0 0.0
        %1232 = vmatpush1.msra.mxu0 0.0
        %1233 = vmatprep.subr.mxu0 0.0
        %1234 = vmatpush1.msra.mxu0 0.0
        %1235 = vmatprep.subr.mxu0 0.0
        %1236 = vmatpush1.msra.mxu0 0.0
        %1237 = vmatprep.subr.mxu0 0.0
        %1238 = vmatpush1.msra.mxu0 0.0
        %1239 = vmatprep.subr.mxu0 0.0
        %1240 = vmatpush1.msra.mxu0 0.0
        %1241 = vmatprep.subr.mxu0 0.0
        %1242 = vmatpush1.msra.mxu0 0.0
        %1243 = vmatprep.subr.mxu0 0.0
        %1244 = vmatpush1.msra.mxu0 0.0
        %1245 = vmatprep.subr.mxu0 0.0
        %1246 = vmatpush1.msra.mxu0 0.0
        %1247 = vmatprep.subr.mxu0 0.0
        %1248 = vmatpush1.msra.mxu0 0.0
        %1249 = vmatprep.mubr.f32.mxu0 0.0
        %v1250 = vand.u32 %v342, 4294901760
        %v1251 = vsub.f32 %v342, %v1250
        %v1252 = vand.u32 %v1251, 4294901760
        %1253 = vmatmul.mubr.f32.gmra.mrb[0].mxu0 %v1252
        %v1254 = vpop.f32.mrb[0].mxu0
        %v1255 = vadd.f32 %v1177, %v1254
        %v1256 = vpop.f32.mrb[0].mxu0
        %1257 = vdwg.mxu0
        %1258 = vmatprep.subr.mxu0 0.0
        %v1259 = vand.u32 %v325, 4294901760
        %v1260 = vsub.f32 %v325, %v1259
        %v1261 = vand.u32 %v1260, 4294901760
        %1262 = vmatpush1.msra.mxu0 %v1261
        %1263 = vmatprep.subr.mxu0 0.0
        %v1264 = vand.u32 %v328, 4294901760
        %v1265 = vsub.f32 %v328, %v1264
        %v1266 = vand.u32 %v1265, 4294901760
        %1267 = vmatpush1.msra.mxu0 %v1266
        %1268 = vmatprep.subr.mxu0 0.0
        %v1269 = vand.u32 %v331, 4294901760
        %v1270 = vsub.f32 %v331, %v1269
        %v1271 = vand.u32 %v1270, 4294901760
        %1272 = vmatpush1.msra.mxu0 %v1271
        %1273 = vmatprep.subr.mxu0 0.0
        %v1274 = vand.u32 %v334, 4294901760
        %v1275 = vsub.f32 %v334, %v1274
        %v1276 = vand.u32 %v1275, 4294901760
        %1277 = vmatpush1.msra.mxu0 %v1276
        %1278 = vmatprep.subr.mxu0 0.0
        %v1279 = vand.u32 %v351, 4294901760
        %v1280 = vsub.f32 %v351, %v1279
        %v1281 = vand.u32 %v1280, 4294901760
        %1282 = vmatpush1.msra.mxu0 %v1281
        %1283 = vmatprep.subr.mxu0 0.0
        %1284 = vmatpush1.msra.mxu0 0.0
        %1285 = vmatprep.subr.mxu0 0.0
        %1286 = vmatpush1.msra.mxu0 0.0
        %1287 = vmatprep.subr.mxu0 0.0
        %1288 = vmatpush1.msra.mxu0 0.0
        %1289 = vmatprep.subr.mxu0 0.0
        %1290 = vmatpush1.msra.mxu0 0.0
        %1291 = vmatprep.subr.mxu0 0.0
        %1292 = vmatpush1.msra.mxu0 0.0
        %1293 = vmatprep.subr.mxu0 0.0
        %1294 = vmatpush1.msra.mxu0 0.0
        %1295 = vmatprep.subr.mxu0 0.0
        %1296 = vmatpush1.msra.mxu0 0.0
        %1297 = vmatprep.subr.mxu0 0.0
        %1298 = vmatpush1.msra.mxu0 0.0
        %1299 = vmatprep.subr.mxu0 0.0
        %1300 = vmatpush1.msra.mxu0 0.0
        %1301 = vmatprep.subr.mxu0 0.0
        %1302 = vmatpush1.msra.mxu0 0.0
        %1303 = vmatprep.subr.mxu0 0.0
        %1304 = vmatpush1.msra.mxu0 0.0
        %1305 = vmatprep.subr.mxu0 0.0
        %1306 = vmatpush1.msra.mxu0 0.0
        %1307 = vmatprep.subr.mxu0 0.0
        %1308 = vmatpush1.msra.mxu0 0.0
        %1309 = vmatprep.subr.mxu0 0.0
        %1310 = vmatpush1.msra.mxu0 0.0
        %1311 = vmatprep.subr.mxu0 0.0
        %1312 = vmatpush1.msra.mxu0 0.0
        %1313 = vmatprep.subr.mxu0 0.0
        %1314 = vmatpush1.msra.mxu0 0.0
        %1315 = vmatprep.subr.mxu0 0.0
        %1316 = vmatpush1.msra.mxu0 0.0
        %1317 = vmatprep.subr.mxu0 0.0
        %1318 = vmatpush1.msra.mxu0 0.0
        %1319 = vmatprep.subr.mxu0 0.0
        %1320 = vmatpush1.msra.mxu0 0.0
        %1321 = vmatprep.subr.mxu0 0.0
        %1322 = vmatpush1.msra.mxu0 0.0
        %1323 = vmatprep.subr.mxu0 0.0
        %1324 = vmatpush1.msra.mxu0 0.0
        %1325 = vmatprep.subr.mxu0 0.0
        %1326 = vmatpush1.msra.mxu0 0.0
        %1327 = vmatprep.subr.mxu0 0.0
        %1328 = vmatpush1.msra.mxu0 0.0
        %1329 = vmatprep.subr.mxu0 0.0
        %1330 = vmatpush1.msra.mxu0 0.0
        %1331 = vmatprep.subr.mxu0 0.0
        %1332 = vmatpush1.msra.mxu0 0.0
        %1333 = vmatprep.subr.mxu0 0.0
        %1334 = vmatpush1.msra.mxu0 0.0
        %1335 = vmatprep.subr.mxu0 0.0
        %1336 = vmatpush1.msra.mxu0 0.0
        %1337 = vmatprep.mubr.f32.mxu0 0.0
        %v1338 = vand.u32 %v342, 4294901760
        %1339 = vmatmul.mubr.f32.gmra.mrb[0].mxu0 %v1338
        %v1340 = vpop.f32.mrb[0].mxu0
        %v1341 = vadd.f32 %v1255, %v1340
        %v1342 = vpop.f32.mrb[0].mxu0
        %1343 = vdwg.mxu0
        %1344 = vmatprep.subr.mxu0 0.0
        %v1345 = vand.u32 %v325, 4294901760
        %1346 = vmatpush1.msra.mxu0 %v1345
        %1347 = vmatprep.subr.mxu0 0.0
        %v1348 = vand.u32 %v328, 4294901760
        %1349 = vmatpush1.msra.mxu0 %v1348
        %1350 = vmatprep.subr.mxu0 0.0
        %v1351 = vand.u32 %v331, 4294901760
        %1352 = vmatpush1.msra.mxu0 %v1351
        %1353 = vmatprep.subr.mxu0 0.0
        %v1354 = vand.u32 %v334, 4294901760
        %1355 = vmatpush1.msra.mxu0 %v1354
        %1356 = vmatprep.subr.mxu0 0.0
        %v1357 = vand.u32 %v351, 4294901760
        %1358 = vmatpush1.msra.mxu0 %v1357
        %1359 = vmatprep.subr.mxu0 0.0
        %1360 = vmatpush1.msra.mxu0 0.0
        %1361 = vmatprep.subr.mxu0 0.0
        %1362 = vmatpush1.msra.mxu0 0.0
        %1363 = vmatprep.subr.mxu0 0.0
        %1364 = vmatpush1.msra.mxu0 0.0
        %1365 = vmatprep.subr.mxu0 0.0
        %1366 = vmatpush1.msra.mxu0 0.0
        %1367 = vmatprep.subr.mxu0 0.0
        %1368 = vmatpush1.msra.mxu0 0.0
        %1369 = vmatprep.subr.mxu0 0.0
        %1370 = vmatpush1.msra.mxu0 0.0
        %1371 = vmatprep.subr.mxu0 0.0
        %1372 = vmatpush1.msra.mxu0 0.0
        %1373 = vmatprep.subr.mxu0 0.0
        %1374 = vmatpush1.msra.mxu0 0.0
        %1375 = vmatprep.subr.mxu0 0.0
        %1376 = vmatpush1.msra.mxu0 0.0
        %1377 = vmatprep.subr.mxu0 0.0
        %1378 = vmatpush1.msra.mxu0 0.0
        %1379 = vmatprep.subr.mxu0 0.0
        %1380 = vmatpush1.msra.mxu0 0.0
        %1381 = vmatprep.subr.mxu0 0.0
        %1382 = vmatpush1.msra.mxu0 0.0
        %1383 = vmatprep.subr.mxu0 0.0
        %1384 = vmatpush1.msra.mxu0 0.0
        %1385 = vmatprep.subr.mxu0 0.0
        %1386 = vmatpush1.msra.mxu0 0.0
        %1387 = vmatprep.subr.mxu0 0.0
        %1388 = vmatpush1.msra.mxu0 0.0
        %1389 = vmatprep.subr.mxu0 0.0
        %1390 = vmatpush1.msra.mxu0 0.0
        %1391 = vmatprep.subr.mxu0 0.0
        %1392 = vmatpush1.msra.mxu0 0.0
        %1393 = vmatprep.subr.mxu0 0.0
        %1394 = vmatpush1.msra.mxu0 0.0
        %1395 = vmatprep.subr.mxu0 0.0
        %1396 = vmatpush1.msra.mxu0 0.0
        %1397 = vmatprep.subr.mxu0 0.0
        %1398 = vmatpush1.msra.mxu0 0.0
        %1399 = vmatprep.subr.mxu0 0.0
        %1400 = vmatpush1.msra.mxu0 0.0
        %1401 = vmatprep.subr.mxu0 0.0
        %1402 = vmatpush1.msra.mxu0 0.0
        %1403 = vmatprep.subr.mxu0 0.0
        %1404 = vmatpush1.msra.mxu0 0.0
        %1405 = vmatprep.subr.mxu0 0.0
        %1406 = vmatpush1.msra.mxu0 0.0
        %1407 = vmatprep.subr.mxu0 0.0
        %1408 = vmatpush1.msra.mxu0 0.0
        %1409 = vmatprep.subr.mxu0 0.0
        %1410 = vmatpush1.msra.mxu0 0.0
        %1411 = vmatprep.subr.mxu0 0.0
        %1412 = vmatpush1.msra.mxu0 0.0
        %1413 = vmatprep.mubr.f32.mxu0 0.0
        %v1414 = vand.u32 %v342, 4294901760
        %1415 = vmatmul.mubr.f32.gmra.mrb[0].mxu0 %v1414
        %v1416 = vpop.f32.mrb[0].mxu0
        %v1417 = vadd.f32 %v1341, %v1416
        %v1418 = vpop.f32.mrb[0].mxu0
        %1419 = vdwg.mxu0
        %vm1420 = vcmp.ge.f32.partialorder %v918, 0.0
        %vm1421 = vcmp.ge.f32.partialorder %v920, 0.0
        %vm1422 = vcmp.ge.f32.partialorder %v1417, 0.0
        %v1423 = vmul.f32 %v918, 0.1
        %v1424 = vmul.f32 %v920, 0.1
        %v1425 = vmul.f32 %v1417, 0.1
        %v1426 = vsel %vm1420, %v918, %v1423
        %v1427 = vsel %vm1421, %v920, %v1424
        %v1428 = vsel %vm1422, %v1417, %v1425
        %v1432 = vrot.slane %v1426, 4
        %v1433 = vrot.slane %v1427, 4
        %v1434 = vrot.slane %v1428, 4
        %1438 = vst [vmem:[%s188] sm:$0xf0] %v1432
        %1439 = vst [vmem:[%s188 + $0x8] sm:$0xf0] %v1433
        %1440 = vst [vmem:[%s188 + $0x10] sm:$0xf0] %v1434
        %1441 = vst [vmem:[%s188 + $0x18] sm:$0xf] %v1432
        %1442 = vst [vmem:[%s188 + $0x20] sm:$0xf] %v1433
        %1443 = vst [vmem:[%s188 + $0x28] sm:$0xf] %v1434
        %p1444 = scmp.lt.s32.totalorder %s17, 1
        %s1445 = scalar_select %p1444, %s17, 1
        %s1446 = smul.addr %s1445, 6
        %s1447 = smul.addr %s1446, 8
        %s1448 = scalar_lea.vmem %s3, %s1447
        // Predicated region
        $region37: #{tpu_custom_call.1} parent=31 // pred_check
          %p1449 = pneg %p103
        $region38: #{tpu_custom_call.1} parent=31 // pred_check_branch
          %1451 = sbr.rel (%p1449) target = $region40
        $region39: #{tpu_custom_call.1} parent=31 // pred_region
          _
        $region40: #{tpu_custom_call.1} parent=31 // pred_fallthru
          _
      $region32: #{tpu_custom_call.1} parent=5 // pred_fallthru
        _
      %p1452 = scmp.le.s32.totalorder 2, %s12
      // Predicated region
      $region41: #{tpu_custom_call.1} parent=5 // pred_check
        %p1453 = pneg %p1452
      $region42: #{tpu_custom_call.1} parent=5 // pred_check_branch
        %1455 = sbr.rel (%p1453) target = $region44
      $region43: #{tpu_custom_call.1} parent=5 // pred_region
        %s1456 = ssub.s32 %s12, 2
        // Predicated region
        $region45: #{tpu_custom_call.1} parent=43 // pred_check
          %p1457 = pneg %p109
        $region46: #{tpu_custom_call.1} parent=43 // pred_check_branch
          %1459 = sbr.rel (%p1457) target = $region48
        $region47: #{tpu_custom_call.1} parent=43 // pred_region
          %p1460 = scmp.lt.s32.totalorder %s18, 1
          %s1461 = scalar_select %p1460, %s18, 1
          %s1462 = smul.addr %s1461, 6
          %s1463 = smul.addr %s1462, 8
          %s1464 = scalar_lea.vmem %s3, %s1463
        $region48: #{tpu_custom_call.1} parent=43 // pred_fallthru
          _
      $region44: #{tpu_custom_call.1} parent=5 // pred_fallthru
        _
    $region6: #{tpu_custom_call.1} parent=1 // loop_footer
      %s16 = sadd.s32 1, %s12
    $region7: #{tpu_custom_call.1} parent=1 // loop_footer_branch
      %11 = sbr.rel target = $region3
    $region8: #{tpu_custom_call.1} parent=1 // loop_exit
      _
    %1465 = vsyncpa [#allocation3], 1
    %s1466 = scalar_lea.sflag [#allocation3], 1
    %1467 = vsyncpa %s1466, 1

</llo_original>
